<compile_context>
chip_gen: v7x
topology: tpu7x:2x2x1
jax: 0.10.0
libtpu: 0.0.40
codegen_flags: <defaults>
</compile_context>

<pallas_src>
import functools

import jax
import jax.numpy as jnp
from jax.experimental import pallas as pl
from jax.experimental.pallas import tpu as pltpu

MAX_PHI = 0.52
MAX_THRUST = 500000.0


def controller_kernel(x_ref, p_ref, out_ref, *, din, width, offs):
    # Static, sublane-aligned row slices into the single resident parameter buffer
    # (zero runtime cost to form; the buffer was DMA'd into VMEM once for the whole grid).
    def seg(name, rows):
        o = offs[name]
        return p_ref[o:o + rows, :]

    w1 = seg("w1", din)      # (din,   width)
    w2 = seg("w2", width)    # (width, width)   rows/cols >= hidden are zero padding
    w3 = seg("w3", width)    # (width, width)   col 0 pre-scaled by 0.5 (sigmoid-as-tanh)
    pdt = w1.dtype           # param dtype (f32 default; bf16 optional on v6e/v7x)

    b1 = seg("b1", 1).astype(jnp.float32)        # (1, width)
    b2 = seg("b2", 1).astype(jnp.float32)
    b3 = seg("b3", 1).astype(jnp.float32)
    head_mult = seg("hm", 1).astype(jnp.float32)  # [0.5*MAX_THRUST, MAX_PHI, 0, ...]
    head_add = seg("ha", 1).astype(jnp.float32)   # [0.5*MAX_THRUST, 0,       0, ...]

    x = x_ref[...].astype(pdt)                                                       # (B_t, din)
    h1 = jnp.tanh(jnp.dot(x, w1, preferred_element_type=jnp.float32) + b1)            # (B_t, width)
    h2 = jnp.tanh(jnp.dot(h1.astype(pdt), w2, preferred_element_type=jnp.float32) + b2)
    a = jnp.dot(h2.astype(pdt), w3, preferred_element_type=jnp.float32) + b3          # (B_t, width)

    # Fused head: sigmoid(a0)*MAX_THRUST == tanh(a0/2)*0.5*MT + 0.5*MT (a0/2 folded into
    # w3/b3), tanh(a1)*MAX_PHI.  One EUP tanh, one per-column affine, one lane-dense store.
    out_ref[...] = jnp.tanh(a) * head_mult + head_add


def pack_params(params, dim_input, dim_hidden, dim_output, *, param_dtype=jnp.float32):
    """Pack (w1,b1,w2,b2,w3,b3) + fused-head constants into one 128-lane-wide buffer.

    Hidden/output columns (and w2/w3 rows) are zero-padded to `width` lanes so every matmul
    operand and the output slab are lane-dense; padded contributions are exactly zero.
    Segment starts are sublane-aligned (8 rows f32 / 16 rows bf16).  The sigmoid-as-tanh
    pre-scale (z/2) is folded into column 0 of w3/b3 here, so the kernel head is one tanh.
    """
    assert 2 <= dim_output <= dim_hidden
    w1, b1, w2, b2, w3, b3 = [jnp.asarray(a, jnp.float32) for a in params]

    width = max(128, ((max(dim_hidden, dim_output) + 127) // 128) * 128)
    sublane = 16 if param_dtype == jnp.bfloat16 else 8

    # sigmoid(z) = 0.5*tanh(z/2) + 0.5  ->  pre-scale thrust logit (col 0) by 0.5.
    w3 = w3.at[:, 0].multiply(0.5)
    b3 = b3.at[:, 0].multiply(0.5)

    head_mult = jnp.zeros((1, dim_output), jnp.float32)
    head_mult = head_mult.at[0, 0].set(0.5 * MAX_THRUST).at[0, 1].set(MAX_PHI)
    head_add = jnp.zeros((1, dim_output), jnp.float32).at[0, 0].set(0.5 * MAX_THRUST)

    def aligned(n):
        return ((n + sublane - 1) // sublane) * sublane

    def pad_to(a, rows, cols):
        return jnp.pad(a, ((0, rows - a.shape[0]), (0, cols - a.shape[1])))

    # (name, array, rows the kernel will slice)
    segs = (
        ("w1", w1, dim_input),
        ("b1", b1, 1),
        ("w2", w2, width),
        ("b2", b2, 1),
        ("w3", w3, width),
        ("b3", b3, 1),
        ("hm", head_mult, 1),
        ("ha", head_add, 1),
    )
    offs, blocks, r = {}, [], 0
    for name, arr, need_rows in segs:
        offs[name] = r
        rows = aligned(need_rows)
        blocks.append(pad_to(arr, rows, width))
        r += rows
    packed = jnp.concatenate(blocks, axis=0).astype(param_dtype)  # e.g. (304, 128) f32
    meta = {"din": dim_input, "width": width, "dout": dim_output, "rows": r, "offs": offs}
    return packed, meta


def controller_forward_batched(states, packed, meta, *, block_b=128):
    """states: (B, din) -> (B, dout) with column 0 = thrust, column 1 = phi."""
    din, width, dout, rows = meta["din"], meta["width"], meta["dout"], meta["rows"]
    states = jnp.asarray(states, jnp.float32).reshape(-1, din)
    B = states.shape[0]

    block_b = max(8, min(block_b, ((B + 7) // 8) * 8))
    padded_b = ((B + block_b - 1) // block_b) * block_b
    x = states if padded_b == B else jnp.pad(states, ((0, padded_b - B), (0, 0)))

    kernel = functools.partial(controller_kernel, din=din, width=width, offs=meta["offs"])
    out = pl.pallas_call(
        kernel,
        out_shape=jax.ShapeDtypeStruct((padded_b, width), jnp.float32),
        grid=(padded_b // block_b,),
        in_specs=[
            pl.BlockSpec((block_b, din), lambda i: (i, 0)),      # per-tile states (pipelined)
            pl.BlockSpec((rows, width), lambda i: (0, 0)),       # params: one DMA, resident
        ],
        out_specs=pl.BlockSpec((block_b, width), lambda i: (i, 0)),  # lane-dense output slab
        compiler_params=pltpu.CompilerParams(
            dimension_semantics=("parallel",)),                   # megacore-shard on v7x
    )(x, packed)
    return out[:B, :dout]


def controller_forward(state, packed, meta):
    """Module-faithful forward: state vector -> stack((thrust, phi)) of shape (2,)."""
    return controller_forward_batched(state.reshape(1, -1), packed, meta)[0]


def init_params(key, dim_input, dim_hidden, dim_output):
    # Deterministic init mimicking PyTorch nn.Linear's U(-1/sqrt(fan_in), 1/sqrt(fan_in)).
    def linear(k, fan_in, fan_out):
        kw, kb = jax.random.split(k)
        bound = 1.0 / jnp.sqrt(fan_in)
        w = jax.random.uniform(kw, (fan_in, fan_out), jnp.float32, -bound, bound)
        b = jax.random.uniform(kb, (1, fan_out), jnp.float32, -bound, bound)
        return w, b

    k1, k2, k3 = jax.random.split(key, 3)
    w1, b1 = linear(k1, dim_input, dim_hidden)
    w2, b2 = linear(k2, dim_hidden, dim_hidden)
    w3, b3 = linear(k3, dim_hidden, dim_output)
    return (w1, b1, w2, b2, w3, b3)


def reference_forward(state, params):
    # Pure-JAX reference of the PyTorch forward, for validation.
    w1, b1, w2, b2, w3, b3 = params
    x = state.reshape(1, -1)
    h1 = jnp.tanh(x @ w1 + b1)
    h2 = jnp.tanh(h1 @ w2 + b2)
    a = (h2 @ w3 + b3)[0]
    thrust = jax.nn.sigmoid(a[0]) * MAX_THRUST
    phi = jnp.tanh(a[1]) * MAX_PHI
    return jnp.stack((thrust, phi), axis=0)


if __name__ == "__main__":
    dim_input, dim_hidden, dim_output = 8, 32, 2

    key = jax.random.PRNGKey(0)
    k_params, k_state, k_batch = jax.random.split(key, 3)
    params = init_params(k_params, dim_input, dim_hidden, dim_output)

    # Pack once (outside the per-call hot path); the kernel then sees exactly two operands.
    packed, meta = pack_params(params, dim_input, dim_hidden, dim_output)

    # 1) Module-faithful single-state forward (shape (2,)).
    state = jax.random.normal(k_state, (dim_input,), dtype=jnp.float32)
    out = jax.block_until_ready(controller_forward(state, packed, meta))
    ref = reference_forward(state, params)
    assert out.shape == (dim_output,)
    assert jnp.allclose(out, ref, rtol=1e-4, atol=1e-2), (out, ref)

    # 2) Batched path (amortizes dispatch/DMA; exercises the grid + resident param buffer).
    B = 200
    states = jax.random.normal(k_batch, (B, dim_input), dtype=jnp.float32)
    outs = jax.block_until_ready(controller_forward_batched(states, packed, meta))
    refs = jax.vmap(lambda s: reference_forward(s, params))(states)
    assert outs.shape == (B, dim_output)
    assert jnp.allclose(outs, refs, rtol=5e-4, atol=1e-2), (outs, refs)

    print("KERNEL_OK")
</pallas_src>

<mosaic_0001>
module attributes {stable_mosaic.version = 11 : i64} {
  func.func @controller_kernel(%arg0: i32, %arg1: memref<8x8xf32, #tpu.memory_space<vmem>>, %arg2: memref<304x128xf32, #tpu.memory_space<vmem>>, %arg3: memref<8x128xf32, #tpu.memory_space<vmem>>) attributes {dimension_semantics = [#tpu.dimension_semantics<parallel>], iteration_bounds = array<i64: 1>, scalar_prefetch = 0 : i64, scratch_operands = 0 : i64, tpu.core_type = #tpu.core_type<tc>, window_params = [{transform_indices = @transform_0, window_bounds = array<i64: 8, 8>}, {pipeline_mode = #tpu.pipeline_mode<synchronous>, transform_indices = @transform_1, window_bounds = array<i64: 304, 128>}, {transform_indices = @transform_2, window_bounds = array<i64: 8, 128>}]} {
    %c0 = arith.constant 0 : index
    %c0_0 = arith.constant 0 : index
    %0 = vector.load %arg2[%c0, %c0_0] : memref<304x128xf32, #tpu.memory_space<vmem>>, vector<8x128xf32>
    %c16 = arith.constant 16 : index
    %c0_1 = arith.constant 0 : index
    %1 = vector.load %arg2[%c16, %c0_1] : memref<304x128xf32, #tpu.memory_space<vmem>>, vector<128x128xf32>
    %c152 = arith.constant 152 : index
    %c0_2 = arith.constant 0 : index
    %2 = vector.load %arg2[%c152, %c0_2] : memref<304x128xf32, #tpu.memory_space<vmem>>, vector<128x128xf32>
    %c8 = arith.constant 8 : index
    %c0_3 = arith.constant 0 : index
    %3 = vector.load %arg2[%c8, %c0_3] : memref<304x128xf32, #tpu.memory_space<vmem>>, vector<1x128xf32>
    %c144 = arith.constant 144 : index
    %c0_4 = arith.constant 0 : index
    %4 = vector.load %arg2[%c144, %c0_4] : memref<304x128xf32, #tpu.memory_space<vmem>>, vector<1x128xf32>
    %c280 = arith.constant 280 : index
    %c0_5 = arith.constant 0 : index
    %5 = vector.load %arg2[%c280, %c0_5] : memref<304x128xf32, #tpu.memory_space<vmem>>, vector<1x128xf32>
    %c288 = arith.constant 288 : index
    %c0_6 = arith.constant 0 : index
    %6 = vector.load %arg2[%c288, %c0_6] : memref<304x128xf32, #tpu.memory_space<vmem>>, vector<1x128xf32>
    %c296 = arith.constant 296 : index
    %c0_7 = arith.constant 0 : index
    %7 = vector.load %arg2[%c296, %c0_7] : memref<304x128xf32, #tpu.memory_space<vmem>>, vector<1x128xf32>
    %c0_8 = arith.constant 0 : index
    %c0_9 = arith.constant 0 : index
    %8 = vector.load %arg1[%c0_8, %c0_9] : memref<8x8xf32, #tpu.memory_space<vmem>>, vector<8x8xf32>
    %cst = arith.constant dense<0.000000e+00> : vector<8x128xf32>
    %9 = tpu.matmul %8, %0, %cst {dimension_numbers = #tpu.dot_dimension_numbers<[1], [0], [0], [1], [0, 0, 1, 1], [], []>} : vector<8x8xf32>, vector<8x128xf32>, vector<8x128xf32> -> vector<8x128xf32>
    %10 = vector.broadcast %3 : vector<1x128xf32> to vector<8x128xf32>
    %11 = arith.addf %9, %10 : vector<8x128xf32>
    %12 = math.tanh %11 : vector<8x128xf32>
    %cst_10 = arith.constant dense<0.000000e+00> : vector<8x128xf32>
    %13 = tpu.matmul %12, %1, %cst_10 {dimension_numbers = #tpu.dot_dimension_numbers<[1], [0], [0], [1], [0, 0, 1, 1], [], []>} : vector<8x128xf32>, vector<128x128xf32>, vector<8x128xf32> -> vector<8x128xf32>
    %14 = vector.broadcast %4 : vector<1x128xf32> to vector<8x128xf32>
    %15 = arith.addf %13, %14 : vector<8x128xf32>
    %16 = math.tanh %15 : vector<8x128xf32>
    %cst_11 = arith.constant dense<0.000000e+00> : vector<8x128xf32>
    %17 = tpu.matmul %16, %2, %cst_11 {dimension_numbers = #tpu.dot_dimension_numbers<[1], [0], [0], [1], [0, 0, 1, 1], [], []>} : vector<8x128xf32>, vector<128x128xf32>, vector<8x128xf32> -> vector<8x128xf32>
    %18 = vector.broadcast %5 : vector<1x128xf32> to vector<8x128xf32>
    %19 = arith.addf %17, %18 : vector<8x128xf32>
    %20 = math.tanh %19 : vector<8x128xf32>
    %21 = vector.broadcast %6 : vector<1x128xf32> to vector<8x128xf32>
    %22 = arith.mulf %20, %21 : vector<8x128xf32>
    %23 = vector.broadcast %7 : vector<1x128xf32> to vector<8x128xf32>
    %24 = arith.addf %22, %23 : vector<8x128xf32>
    %c0_12 = arith.constant 0 : index
    %c0_13 = arith.constant 0 : index
    %25 = vector.load %arg3[%c0_12, %c0_13] : memref<8x128xf32, #tpu.memory_space<vmem>>, vector<8x128xf32>
    tpu.vector_store %arg3[%c0_12, %c0_13], %24 {strides = array<i32>} : memref<8x128xf32, #tpu.memory_space<vmem>>, vector<8x128xf32>,
    return
  }
  func.func @transform_0(%arg0: i32) -> (i32, i32) {
    %c0_i32 = arith.constant 0 : i32
    %c0_i32_0 = arith.constant 0 : i32
    return %arg0, %c0_i32 : i32, i32
  }
  func.func @transform_1(%arg0: i32) -> (i32, i32) {
    %c0_i32 = arith.constant 0 : i32
    %c0_i32_0 = arith.constant 0 : i32
    %c0_i32_1 = arith.constant 0 : i32
    return %c0_i32, %c0_i32_0 : i32, i32
  }
  func.func @transform_2(%arg0: i32) -> (i32, i32) {
    %c0_i32 = arith.constant 0 : i32
    %c0_i32_0 = arith.constant 0 : i32
    return %arg0, %c0_i32 : i32, i32
  }
}

</mosaic_0001>

<llo_original>
// kernel: tpu_custom_call.1
$region0: #{tpu_custom_call.1}
  #allocation0 [shape = 'u32[]', space=smem, size = 0x4, offset = 0x4, fixed_abs, tag = 'smem constant byte address 0x4 - core index']
  #allocation1 [shape = 'u32[144,128]{1,0:T(1,128)}', space=vmem, size = 0x12000, scoped, tag = 'internal scratch']
  %s0 = inlined_call_operand.hbm [shape: f32[8,8], index: 0, kind: input, shape index: {}]
  %s1 = inlined_call_operand.hbm [shape: f32[304,128], index: 1, kind: input, shape index: {}]
  %s2 = inlined_call_operand.hbm [shape: f32[8,128], index: 2, kind: output, shape index: {}]
  %s3 = sld [smem:[#allocation0]]
  $region26: #{tpu_custom_call.1} parent=0
    _
  %s5 = ssub.s32 1, %s3
  %s6 = scalar_select 0, %s5, %s3
  $region1: #{tpu_custom_call.1} parent=0
    #allocation2 [shape = 'u8[4096]{0}', space=vmem, size = 0x1000, scoped, tag = 'input window, operand 0, single buffered']
    #allocation3 [shape = 's32[1]{0}', space=sflag, size = 0x4, scoped, tag = 'scoped memory for tpu_custom_call.1']
    #allocation4 [shape = 's32[1]{0}', space=sflag, size = 0x4, scoped, tag = 'scoped memory for tpu_custom_call.1']
    #allocation5 [shape = 'u8[155648]{0}', space=vmem, size = 0x26000, scoped, tag = 'input window, operand 1, single buffered']
    #allocation6 [shape = 's32[1]{0}', space=sflag, size = 0x4, scoped, tag = 'scoped memory for tpu_custom_call.1']
    #allocation7 [shape = 'u8[4096]{0}', space=vmem, size = 0x1000, scoped, tag = 'output window, operand 0, single buffered']
    %7 = vsyncpa [#allocation3], 0
    %8 = vsyncpa [#allocation6], 0
    %9 = vsyncpa [#allocation4], 0
    // Predicated region
    $region2: #{tpu_custom_call.1} parent=1 // pred_check
      _
    $region3: #{tpu_custom_call.1} parent=1 // pred_check_branch
      %11 = sbr.rel (0) target = $region5
    $region4: #{tpu_custom_call.1} parent=1 // pred_region
      %s13 = ssub.s32 128, 128
      %14 = vsyncadd [#allocation3], %s13
      %s16 = sshll.u32 [#allocation2], 4
      %s17 = int_to_ptr.vmem [resolvable:$true] %s16
      %19 = dma.hbm_to_vmem [thread:$0]  %s0, 128, %s17, [#allocation3]
    $region5: #{tpu_custom_call.1} parent=1 // pred_fallthru
      _
    // Predicated region
    $region6: #{tpu_custom_call.1} parent=1 // pred_check
      _
    $region7: #{tpu_custom_call.1} parent=1 // pred_check_branch
      %21 = sbr.rel (0) target = $region9
    $region8: #{tpu_custom_call.1} parent=1 // pred_region
      %s23 = ssub.s32 4864, 4864
      %24 = vsyncadd [#allocation6], %s23
      %s25 = sshll.u32 [#allocation5], 4
      %s26 = int_to_ptr.vmem [resolvable:$true] %s25
      %31 = dma.hbm_to_vmem [thread:$0]  %s1, 4864, %s26, [#allocation6], 128, 128, 8
    $region9: #{tpu_custom_call.1} parent=1 // pred_fallthru
      _
    // Predicated region
    $region10: #{tpu_custom_call.1} parent=1 // pred_check
      _
    $region11: #{tpu_custom_call.1} parent=1 // pred_check_branch
      %33 = sbr.rel (0) target = $region13
    $region12: #{tpu_custom_call.1} parent=1 // pred_region
      %34 = dma.done [#allocation3], 128
    $region13: #{tpu_custom_call.1} parent=1 // pred_fallthru
      _
    // Predicated region
    $region14: #{tpu_custom_call.1} parent=1 // pred_check
      _
    $region15: #{tpu_custom_call.1} parent=1 // pred_check_branch
      %36 = sbr.rel (0) target = $region17
    $region16: #{tpu_custom_call.1} parent=1 // pred_region
      %37 = dma.done [#allocation6], 4864
    $region17: #{tpu_custom_call.1} parent=1 // pred_fallthru
      _
    %v38 = vld [vmem:[#allocation5] sm:$0xff]
    %v39 = vld [vmem:[#allocation5 + $0x10] sm:$0xff]
    %v40 = vld [vmem:[#allocation5 + $0x18] sm:$0xff]
    %v41 = vld [vmem:[#allocation5 + $0x20] sm:$0xff]
    %v42 = vld [vmem:[#allocation5 + $0x28] sm:$0xff]
    %v43 = vld [vmem:[#allocation5 + $0x30] sm:$0xff]
    %v44 = vld [vmem:[#allocation5 + $0x38] sm:$0xff]
    %v45 = vld [vmem:[#allocation5 + $0x40] sm:$0xff]
    %v46 = vld [vmem:[#allocation5 + $0x48] sm:$0xff]
    %v47 = vld [vmem:[#allocation5 + $0x50] sm:$0xff]
    %v48 = vld [vmem:[#allocation5 + $0x58] sm:$0xff]
    %v49 = vld [vmem:[#allocation5 + $0x60] sm:$0xff]
    %v50 = vld [vmem:[#allocation5 + $0x68] sm:$0xff]
    %v51 = vld [vmem:[#allocation5 + $0x70] sm:$0xff]
    %v52 = vld [vmem:[#allocation5 + $0x78] sm:$0xff]
    %v53 = vld [vmem:[#allocation5 + $0x80] sm:$0xff]
    %v54 = vld [vmem:[#allocation5 + $0x88] sm:$0xff]
    %v55 = vld [vmem:[#allocation5 + $0x98] sm:$0xff]
    %v56 = vld [vmem:[#allocation5 + $0xa0] sm:$0xff]
    %v57 = vld [vmem:[#allocation5 + $0xa8] sm:$0xff]
    %v58 = vld [vmem:[#allocation5 + $0xb0] sm:$0xff]
    %v59 = vld [vmem:[#allocation5 + $0xb8] sm:$0xff]
    %v60 = vld [vmem:[#allocation5 + $0xc0] sm:$0xff]
    %v61 = vld [vmem:[#allocation5 + $0xc8] sm:$0xff]
    %v62 = vld [vmem:[#allocation5 + $0xd0] sm:$0xff]
    %v63 = vld [vmem:[#allocation5 + $0xd8] sm:$0xff]
    %v64 = vld [vmem:[#allocation5 + $0xe0] sm:$0xff]
    %v65 = vld [vmem:[#allocation5 + $0xe8] sm:$0xff]
    %v66 = vld [vmem:[#allocation5 + $0xf0] sm:$0xff]
    %v67 = vld [vmem:[#allocation5 + $0xf8] sm:$0xff]
    %v68 = vld [vmem:[#allocation5 + $0x100] sm:$0xff]
    %v69 = vld [vmem:[#allocation5 + $0x108] sm:$0xff]
    %v70 = vld [vmem:[#allocation5 + $0x110] sm:$0xff]
    %v71 = vld [vmem:[#allocation5 + $0x8] sm:$0x1]
    %v72 = vld [vmem:[#allocation5 + $0x90] sm:$0x1]
    %v73 = vld [vmem:[#allocation5 + $0x118] sm:$0x1]
    %v74 = vld [vmem:[#allocation5 + $0x120] sm:$0x1]
    %v75 = vld [vmem:[#allocation5 + $0x128] sm:$0x1]
    %v76 = vld [vmem:[#allocation2] sm:$0xff]
    %v77 = vlaneseq
    %v78 = vshrl.u32 %v77, 7
    %v79 = vsub.s32 0, %v78
    %v80 = vrot.slane %v71, %v79
    %vm81 = vcmask 64512
    %v83 = vsel %vm81, %v76, 0
    %85 = vmatprep.subr.mxu0 0.0
    %86 = vmatpush1.msra.mxu0 %v38
    %87 = vmatprep.subr.mxu0 0.0
    %88 = vmatpush1.msra.mxu0 0.0
    %89 = vmatprep.subr.mxu0 0.0
    %90 = vmatpush1.msra.mxu0 0.0
    %91 = vmatprep.subr.mxu0 0.0
    %92 = vmatpush1.msra.mxu0 0.0
    %93 = vmatprep.subr.mxu0 0.0
    %94 = vmatpush1.msra.mxu0 0.0
    %95 = vmatprep.subr.mxu0 0.0
    %96 = vmatpush1.msra.mxu0 0.0
    %97 = vmatprep.subr.mxu0 0.0
    %98 = vmatpush1.msra.mxu0 0.0
    %99 = vmatprep.subr.mxu0 0.0
    %100 = vmatpush1.msra.mxu0 0.0
    %101 = vmatprep.subr.mxu0 0.0
    %102 = vmatpush1.msra.mxu0 0.0
    %103 = vmatprep.subr.mxu0 0.0
    %104 = vmatpush1.msra.mxu0 0.0
    %105 = vmatprep.subr.mxu0 0.0
    %106 = vmatpush1.msra.mxu0 0.0
    %107 = vmatprep.subr.mxu0 0.0
    %108 = vmatpush1.msra.mxu0 0.0
    %109 = vmatprep.subr.mxu0 0.0
    %110 = vmatpush1.msra.mxu0 0.0
    %111 = vmatprep.subr.mxu0 0.0
    %112 = vmatpush1.msra.mxu0 0.0
    %113 = vmatprep.subr.mxu0 0.0
    %114 = vmatpush1.msra.mxu0 0.0
    %115 = vmatprep.subr.mxu0 0.0
    %116 = vmatpush1.msra.mxu0 0.0
    %117 = vmatprep.subr.mxu0 0.0
    %118 = vmatpush1.msra.mxu0 0.0
    %119 = vmatprep.subr.mxu0 0.0
    %120 = vmatpush1.msra.mxu0 0.0
    %121 = vmatprep.subr.mxu0 0.0
    %122 = vmatpush1.msra.mxu0 0.0
    %123 = vmatprep.subr.mxu0 0.0
    %124 = vmatpush1.msra.mxu0 0.0
    %125 = vmatprep.subr.mxu0 0.0
    %126 = vmatpush1.msra.mxu0 0.0
    %127 = vmatprep.subr.mxu0 0.0
    %128 = vmatpush1.msra.mxu0 0.0
    %129 = vmatprep.subr.mxu0 0.0
    %130 = vmatpush1.msra.mxu0 0.0
    %131 = vmatprep.subr.mxu0 0.0
    %132 = vmatpush1.msra.mxu0 0.0
    %133 = vmatprep.subr.mxu0 0.0
    %134 = vmatpush1.msra.mxu0 0.0
    %135 = vmatprep.subr.mxu0 0.0
    %136 = vmatpush1.msra.mxu0 0.0
    %137 = vmatprep.subr.mxu0 0.0
    %138 = vmatpush1.msra.mxu0 0.0
    %139 = vmatprep.subr.mxu0 0.0
    %140 = vmatpush1.msra.mxu0 0.0
    %141 = vmatprep.subr.mxu0 0.0
    %142 = vmatpush1.msra.mxu0 0.0
    %143 = vmatprep.subr.mxu0 0.0
    %144 = vmatpush1.msra.mxu0 0.0
    %145 = vmatprep.subr.mxu0 0.0
    %146 = vmatpush1.msra.mxu0 0.0
    %147 = vmatprep.subr.mxu0 0.0
    %148 = vmatpush1.msra.mxu0 0.0
    %149 = vmatprep.mubr.f32.mxu0 0.0
    %150 = vmatmul.mubr.f32.gmra.mrb[0].mxu0 %v83
    %v151 = vpop.f32.mrb[0].mxu0
    %v152 = vadd.f32 %v80, %v151
    %v153 = vpop.f32.mrb[0].mxu0
    %154 = vdwg.mxu0
    %v155 = vtanh.pop %v152
    %v156 = vlaneseq
    %v157 = vshrl.u32 %v156, 7
    %v158 = vsub.s32 0, %v157
    %v159 = vrot.slane %v72, %v158
    %160 = vmatprep.subr.mxu0 0.0
    %161 = vmatpush1.msra.mxu0 %v39
    %162 = vmatprep.subr.mxu0 0.0
    %163 = vmatpush1.msra.mxu0 %v40
    %164 = vmatprep.subr.mxu0 0.0
    %165 = vmatpush1.msra.mxu0 %v41
    %166 = vmatprep.subr.mxu0 0.0
    %167 = vmatpush1.msra.mxu0 %v42
    %168 = vmatprep.subr.mxu0 0.0
    %169 = vmatpush1.msra.mxu0 %v43
    %170 = vmatprep.subr.mxu0 0.0
    %171 = vmatpush1.msra.mxu0 %v44
    %172 = vmatprep.subr.mxu0 0.0
    %173 = vmatpush1.msra.mxu0 %v45
    %174 = vmatprep.subr.mxu0 0.0
    %175 = vmatpush1.msra.mxu0 %v46
    %176 = vmatprep.subr.mxu0 0.0
    %177 = vmatpush1.msra.mxu0 %v47
    %178 = vmatprep.subr.mxu0 0.0
    %179 = vmatpush1.msra.mxu0 %v48
    %180 = vmatprep.subr.mxu0 0.0
    %181 = vmatpush1.msra.mxu0 %v49
    %182 = vmatprep.subr.mxu0 0.0
    %183 = vmatpush1.msra.mxu0 %v50
    %184 = vmatprep.subr.mxu0 0.0
    %185 = vmatpush1.msra.mxu0 %v51
    %186 = vmatprep.subr.mxu0 0.0
    %187 = vmatpush1.msra.mxu0 %v52
    %188 = vmatprep.subr.mxu0 0.0
    %189 = vmatpush1.msra.mxu0 %v53
    %190 = vmatprep.subr.mxu0 0.0
    %191 = vmatpush1.msra.mxu0 %v54
    %192 = vmatprep.subr.mxu0 0.0
    %193 = vmatpush1.msra.mxu0 0.0
    %194 = vmatprep.subr.mxu0 0.0
    %195 = vmatpush1.msra.mxu0 0.0
    %196 = vmatprep.subr.mxu0 0.0
    %197 = vmatpush1.msra.mxu0 0.0
    %198 = vmatprep.subr.mxu0 0.0
    %199 = vmatpush1.msra.mxu0 0.0
    %200 = vmatprep.subr.mxu0 0.0
    %201 = vmatpush1.msra.mxu0 0.0
    %202 = vmatprep.subr.mxu0 0.0
    %203 = vmatpush1.msra.mxu0 0.0
    %204 = vmatprep.subr.mxu0 0.0
    %205 = vmatpush1.msra.mxu0 0.0
    %206 = vmatprep.subr.mxu0 0.0
    %207 = vmatpush1.msra.mxu0 0.0
    %208 = vmatprep.subr.mxu0 0.0
    %209 = vmatpush1.msra.mxu0 0.0
    %210 = vmatprep.subr.mxu0 0.0
    %211 = vmatpush1.msra.mxu0 0.0
    %212 = vmatprep.subr.mxu0 0.0
    %213 = vmatpush1.msra.mxu0 0.0
    %214 = vmatprep.subr.mxu0 0.0
    %215 = vmatpush1.msra.mxu0 0.0
    %216 = vmatprep.subr.mxu0 0.0
    %217 = vmatpush1.msra.mxu0 0.0
    %218 = vmatprep.subr.mxu0 0.0
    %219 = vmatpush1.msra.mxu0 0.0
    %220 = vmatprep.subr.mxu0 0.0
    %221 = vmatpush1.msra.mxu0 0.0
    %222 = vmatprep.subr.mxu0 0.0
    %223 = vmatpush1.msra.mxu0 0.0
    %224 = vmatprep.mubr.f32.mxu0 0.0
    %225 = vmatmul.mubr.f32.gmra.mrb[0].mxu0 %v155
    %v226 = vpop.f32.mrb[0].mxu0
    %v227 = vadd.f32 %v159, %v226
    %v228 = vpop.f32.mrb[0].mxu0
    %229 = vdwg.mxu0
    %v230 = vtanh.pop %v227
    %v231 = vlaneseq
    %v232 = vshrl.u32 %v231, 7
    %v233 = vsub.s32 0, %v232
    %v234 = vrot.slane %v73, %v233
    %235 = vmatprep.subr.mxu0 0.0
    %236 = vmatpush1.msra.mxu0 %v55
    %237 = vmatprep.subr.mxu0 0.0
    %238 = vmatpush1.msra.mxu0 %v56
    %239 = vmatprep.subr.mxu0 0.0
    %240 = vmatpush1.msra.mxu0 %v57
    %241 = vmatprep.subr.mxu0 0.0
    %242 = vmatpush1.msra.mxu0 %v58
    %243 = vmatprep.subr.mxu0 0.0
    %244 = vmatpush1.msra.mxu0 %v59
    %245 = vmatprep.subr.mxu0 0.0
    %246 = vmatpush1.msra.mxu0 %v60
    %247 = vmatprep.subr.mxu0 0.0
    %248 = vmatpush1.msra.mxu0 %v61
    %249 = vmatprep.subr.mxu0 0.0
    %250 = vmatpush1.msra.mxu0 %v62
    %251 = vmatprep.subr.mxu0 0.0
    %252 = vmatpush1.msra.mxu0 %v63
    %253 = vmatprep.subr.mxu0 0.0
    %254 = vmatpush1.msra.mxu0 %v64
    %255 = vmatprep.subr.mxu0 0.0
    %256 = vmatpush1.msra.mxu0 %v65
    %257 = vmatprep.subr.mxu0 0.0
    %258 = vmatpush1.msra.mxu0 %v66
    %259 = vmatprep.subr.mxu0 0.0
    %260 = vmatpush1.msra.mxu0 %v67
    %261 = vmatprep.subr.mxu0 0.0
    %262 = vmatpush1.msra.mxu0 %v68
    %263 = vmatprep.subr.mxu0 0.0
    %264 = vmatpush1.msra.mxu0 %v69
    %265 = vmatprep.subr.mxu0 0.0
    %266 = vmatpush1.msra.mxu0 %v70
    %267 = vmatprep.subr.mxu0 0.0
    %268 = vmatpush1.msra.mxu0 0.0
    %269 = vmatprep.subr.mxu0 0.0
    %270 = vmatpush1.msra.mxu0 0.0
    %271 = vmatprep.subr.mxu0 0.0
    %272 = vmatpush1.msra.mxu0 0.0
    %273 = vmatprep.subr.mxu0 0.0
    %274 = vmatpush1.msra.mxu0 0.0
    %275 = vmatprep.subr.mxu0 0.0
    %276 = vmatpush1.msra.mxu0 0.0
    %277 = vmatprep.subr.mxu0 0.0
    %278 = vmatpush1.msra.mxu0 0.0
    %279 = vmatprep.subr.mxu0 0.0
    %280 = vmatpush1.msra.mxu0 0.0
    %281 = vmatprep.subr.mxu0 0.0
    %282 = vmatpush1.msra.mxu0 0.0
    %283 = vmatprep.subr.mxu0 0.0
    %284 = vmatpush1.msra.mxu0 0.0
    %285 = vmatprep.subr.mxu0 0.0
    %286 = vmatpush1.msra.mxu0 0.0
    %287 = vmatprep.subr.mxu0 0.0
    %288 = vmatpush1.msra.mxu0 0.0
    %289 = vmatprep.subr.mxu0 0.0
    %290 = vmatpush1.msra.mxu0 0.0
    %291 = vmatprep.subr.mxu0 0.0
    %292 = vmatpush1.msra.mxu0 0.0
    %293 = vmatprep.subr.mxu0 0.0
    %294 = vmatpush1.msra.mxu0 0.0
    %295 = vmatprep.subr.mxu0 0.0
    %296 = vmatpush1.msra.mxu0 0.0
    %297 = vmatprep.subr.mxu0 0.0
    %298 = vmatpush1.msra.mxu0 0.0
    %299 = vmatprep.mubr.f32.mxu0 0.0
    %300 = vmatmul.mubr.f32.gmra.mrb[0].mxu0 %v230
    %v301 = vpop.f32.mrb[0].mxu0
    %v302 = vadd.f32 %v234, %v301
    %v303 = vpop.f32.mrb[0].mxu0
    %304 = vdwg.mxu0
    %v305 = vtanh.pop %v302
    %v306 = vlaneseq
    %v307 = vshrl.u32 %v306, 7
    %v308 = vsub.s32 0, %v307
    %v309 = vrot.slane %v74, %v308
    %v310 = vmul.f32 %v305, %v309
    %v311 = vlaneseq
    %v312 = vshrl.u32 %v311, 7
    %v313 = vsub.s32 0, %v312
    %v314 = vrot.slane %v75, %v313
    %v315 = vadd.f32 %v310, %v314
    %316 = vst [vmem:[#allocation7] sm:$0xff] %v315
    // Predicated region
    $region18: #{tpu_custom_call.1} parent=1 // pred_check
      _
    $region19: #{tpu_custom_call.1} parent=1 // pred_check_branch
      %318 = sbr.rel (0) target = $region21
    $region20: #{tpu_custom_call.1} parent=1 // pred_region
      %s320 = ssub.s32 128, 128
      %321 = vsyncadd [#allocation4], %s320
      %s323 = sshll.u32 [#allocation7], 4
      %s324 = int_to_ptr.vmem [resolvable:$true] %s323
      %326 = dma.vmem_to_hbm [thread:$0]  %s324, 128, %s2, [#allocation4]
    $region21: #{tpu_custom_call.1} parent=1 // pred_fallthru
      _
    // Predicated region
    $region22: #{tpu_custom_call.1} parent=1 // pred_check
      _
    $region23: #{tpu_custom_call.1} parent=1 // pred_check_branch
      %328 = sbr.rel (0) target = $region25
    $region24: #{tpu_custom_call.1} parent=1 // pred_region
      %329 = dma.done [#allocation4], 128
    $region25: #{tpu_custom_call.1} parent=1 // pred_fallthru
      _
    %330 = vsyncpa [#allocation3], 1
    %331 = vsyncpa [#allocation6], 1
    %332 = vsyncpa [#allocation4], 1

</llo_original>
